<compile_context>
chip_gen: v5e
topology: v5e:2x2
jax: 0.10.0
libtpu: 0.0.40
codegen_flags: <defaults>
</compile_context>

<pallas_src>
from typing import Any, NamedTuple

import jax
import jax.numpy as jnp
from jax.experimental import pallas as pl
from jax.experimental.pallas import tpu as pltpu

R_GAS = 8.31446261815324  # scipy.constants.R, J / (mol K)


def _round_up(x: int, m: int) -> int:
    return ((x + m - 1) // m) * m


# ----------------------------------------------------------------------------
# Kernels
# ----------------------------------------------------------------------------
def _uptake_kernel(temp_ref, dG_ref, k_ref, time_ref, uptake_ref):
    """One-shot transcendental kernel.

    temp_ref   : SMEM (1, 1)              scalar temperature
    dG_ref     : VMEM (N_res_pad, 1)      per-residue dG (column)
    k_ref      : VMEM (N_res_pad, 1)      per-residue intrinsic rates (column)
    time_ref   : VMEM (1, N_t_pad)        timepoints (lane-dense row)
    uptake_ref : VMEM (N_res_pad, N_t_pad) output, already in matmul dtype and
                 already laid out as the matmul RHS (no per-step transpose).
    Padded residues (dG=0, k=0) and padded timepoints (t=0) yield exact zeros.
    """
    inv_rt = 1.0 / (R_GAS * temp_ref[0, 0])        # one scalar reciprocal
    pfact = jnp.exp(dG_ref[...] * inv_rt)          # (N_res_pad, 1)
    scaled_k = k_ref[...] / (1.0 + pfact)          # (N_res_pad, 1)
    rates = scaled_k * time_ref[...]               # (N_res_pad, N_t_pad)
    uptake_ref[...] = (1.0 - jnp.exp(-rates)).astype(uptake_ref.dtype)


def _matmul_kernel(X_ref, uptake_ref, out_ref):
    """Per-grid-step: out_tile = X_tile @ uptake (plain NN dot, no casts).

    X_ref      : VMEM (tile_pep, N_res_pad)   streamed, matmul dtype
    uptake_ref : VMEM (N_res_pad, N_t_pad)    resident (constant index_map)
    out_ref    : VMEM (tile_pep, N_t_pad)     float32
    """
    out_ref[...] = jnp.dot(
        X_ref[...], uptake_ref[...], preferred_element_type=jnp.float32
    ).astype(out_ref.dtype)


# ----------------------------------------------------------------------------
# Host-side preparation (run ONCE per fit; only dG changes per iteration)
# ----------------------------------------------------------------------------
class PreparedInputs(NamedTuple):
    X_pad: jax.Array      # (n_pep_pad, n_res_pad), matmul dtype
    k_col: jax.Array      # (n_res_pad, 1) float32
    t_row: jax.Array      # (1, n_t_pad) float32
    n_pep: int
    n_res: int
    n_t: int
    n_res_pad: int
    n_t_pad: int
    tile_pep: int
    matmul_dtype: Any


def _auto_tile_pep(n_pep, n_res_pad, n_t_pad, x_bytes, u_bytes,
                   budget_bytes, align):
    """Largest peptide tile that keeps double-buffered VMEM under budget."""
    fixed = 2 * n_res_pad * n_t_pad * u_bytes                 # resident uptake
    per_row = 2 * (n_res_pad * x_bytes + n_t_pad * 4)         # X tile + f32 out tile
    avail_rows = max(align, (budget_bytes - fixed) // per_row)
    full = _round_up(n_pep, align)
    if full <= avail_rows:
        return full                                           # single grid step
    tile = min(1024, (avail_rows // align) * align)
    return max(align, tile)


def prepare_deltag_inputs(X, k_int, timepoints, *, use_bf16_matmul=True,
                          tile_pep=None,
                          vmem_budget_bytes=40 * 1024 * 1024):
    """Pad/cast the fit-invariant operands once (X, k_int, timepoints)."""
    f32 = jnp.float32
    X = jnp.asarray(X, f32)
    n_pep, n_res = X.shape
    tp = jnp.asarray(timepoints, f32).reshape(-1)
    n_t = tp.shape[0]

    n_res_pad = _round_up(n_res, 128)     # matmul K dim, lane-dense
    n_t_pad = _round_up(n_t, 128)         # output last dim, lane-dense

    matmul_dtype = jnp.bfloat16 if use_bf16_matmul else f32
    x_bytes = 2 if use_bf16_matmul else 4
    align = 16 if use_bf16_matmul else 8  # sublane packing for the X tile

    if tile_pep is None:
        tile_pep = _auto_tile_pep(n_pep, n_res_pad, n_t_pad, x_bytes, x_bytes,
                                  vmem_budget_bytes, align)
    else:
        tile_pep = max(align,
                       _round_up(min(tile_pep, _round_up(n_pep, align)), align))
    n_pep_pad = _round_up(n_pep, tile_pep)

    # X is a 0/1 coupling matrix in pyhdx, so the bf16 cast is bit-exact;
    # padded rows/columns are exact zeros and are sliced off after the kernel.
    X_pad = jnp.zeros((n_pep_pad, n_res_pad), matmul_dtype
                      ).at[:n_pep, :n_res].set(X.astype(matmul_dtype))
    k_col = jnp.zeros((n_res_pad, 1), f32
                      ).at[:n_res, 0].set(jnp.asarray(k_int, f32).reshape(-1))
    t_row = jnp.zeros((1, n_t_pad), f32).at[0, :n_t].set(tp)

    return PreparedInputs(X_pad, k_col, t_row, n_pep, n_res, n_t,
                          n_res_pad, n_t_pad, tile_pep, matmul_dtype)


# ----------------------------------------------------------------------------
# Forward pass
# ----------------------------------------------------------------------------
def deltag_fit_forward_prepared(temperature, dG, prep: PreparedInputs):
    """Per-iteration forward: only dG needs padding each call."""
    f32 = jnp.float32
    temp_2d = jnp.asarray(temperature, f32).reshape(1, 1)
    dG_col = jnp.zeros((prep.n_res_pad, 1), f32
                       ).at[:prep.n_res, 0].set(jnp.asarray(dG, f32).reshape(-1))

    # 1) One-shot uptake table (transcendental work), already transposed and
    #    in matmul dtype so the streaming kernel does zero per-step casts.
    uptake = pl.pallas_call(
        _uptake_kernel,
        out_shape=jax.ShapeDtypeStruct((prep.n_res_pad, prep.n_t_pad),
                                       prep.matmul_dtype),
        in_specs=[
            pl.BlockSpec(memory_space=pltpu.MemorySpace.SMEM),   # temperature
            pl.BlockSpec(memory_space=pltpu.MemorySpace.VMEM),   # dG column
            pl.BlockSpec(memory_space=pltpu.MemorySpace.VMEM),   # k_int column
            pl.BlockSpec(memory_space=pltpu.MemorySpace.VMEM),   # timepoints row
        ],
        out_specs=pl.BlockSpec(memory_space=pltpu.MemorySpace.VMEM),
    )(temp_2d, dG_col, prep.k_col, prep.t_row)

    # 2) Streaming matmul over peptide tiles; uptake is a replicated input
    #    (constant index_map -> fetched once), so the peptide axis can be
    #    "parallel" (megacore-shardable on v7x).
    n_pep_pad = prep.X_pad.shape[0]
    grid = (n_pep_pad // prep.tile_pep,)
    out_pad = pl.pallas_call(
        _matmul_kernel,
        out_shape=jax.ShapeDtypeStruct((n_pep_pad, prep.n_t_pad), f32),
        grid=grid,
        in_specs=[
            pl.BlockSpec((prep.tile_pep, prep.n_res_pad), lambda i: (i, 0)),
            pl.BlockSpec((prep.n_res_pad, prep.n_t_pad), lambda i: (0, 0)),
        ],
        out_specs=pl.BlockSpec((prep.tile_pep, prep.n_t_pad), lambda i: (i, 0)),
        compiler_params=pltpu.CompilerParams(
            dimension_semantics=("parallel",),
            # Portable: safe on v7x's 64 MiB VMEM; can be raised toward
            # ~96 MiB on v5e/v6e (128 MiB VMEM) together with a larger
            # vmem_budget_bytes in prepare_deltag_inputs.
            vmem_limit_bytes=48 * 1024 * 1024,
        ),
    )(prep.X_pad, uptake)

    return out_pad[:prep.n_pep, :prep.n_t]


def deltag_fit_forward(temperature, dG, X, k_int, timepoints, *,
                       use_bf16_matmul=True, tile_pep=None):
    """Convenience wrapper (does per-call padding of everything; for the
    iterative fit, call prepare_deltag_inputs once and reuse it)."""
    prep = prepare_deltag_inputs(X, k_int, timepoints,
                                 use_bf16_matmul=use_bf16_matmul,
                                 tile_pep=tile_pep)
    return deltag_fit_forward_prepared(temperature, dG, prep)


def deltag_fit_reference(temperature, dG, X, k_int, timepoints):
    pfact = jnp.exp(dG / (R_GAS * temperature))
    uptake = 1.0 - jnp.exp(-jnp.matmul(k_int / (1.0 + pfact), timepoints))
    return jnp.matmul(X, uptake)


if __name__ == "__main__":
    key = jax.random.PRNGKey(0)
    k_dg, k_x, k_kint = jax.random.split(key, 3)

    N_PEPTIDES = 16
    N_RESIDUES = 32
    N_TIMEPOINTS = 8

    # Deterministic synthetic "parameter" dG (J/mol), roughly physical range.
    dG = 20000.0 + 5000.0 * jax.random.normal(k_dg, (N_RESIDUES, 1), jnp.float32)

    temperature = jnp.float32(300.0)                       # Kelvin, scalar
    X = (jax.random.uniform(k_x, (N_PEPTIDES, N_RESIDUES)) < 0.3
         ).astype(jnp.float32)                             # 0/1 coupling matrix
    k_int = jax.random.uniform(k_kint, (N_RESIDUES, 1), jnp.float32,
                               minval=0.1, maxval=10.0)    # intrinsic rates (1/s)
    timepoints = jnp.logspace(0.0, 3.0, N_TIMEPOINTS,
                              dtype=jnp.float32).reshape(1, N_TIMEPOINTS)

    ref = deltag_fit_reference(temperature, dG, X, k_int, timepoints)

    # Performance-default path: bf16 X (bit-exact for 0/1 X) + bf16 uptake.
    prep_bf16 = prepare_deltag_inputs(X, k_int, timepoints, use_bf16_matmul=True)
    out_bf16 = jax.block_until_ready(
        deltag_fit_forward_prepared(temperature, dG, prep_bf16))
    assert out_bf16.shape == (N_PEPTIDES, N_TIMEPOINTS)
    assert jnp.allclose(out_bf16, ref, rtol=2e-2, atol=1e-3), \
        "bf16 path mismatch vs reference"

    # Full-precision path: tight tolerance check.
    prep_f32 = prepare_deltag_inputs(X, k_int, timepoints, use_bf16_matmul=False)
    out_f32 = jax.block_until_ready(
        deltag_fit_forward_prepared(temperature, dG, prep_f32))
    assert out_f32.shape == (N_PEPTIDES, N_TIMEPOINTS)
    assert jnp.allclose(out_f32, ref, rtol=1e-5, atol=1e-5), \
        "f32 path mismatch vs reference"

    print("KERNEL_OK")
</pallas_src>

<mosaic_0001>
module attributes {stable_mosaic.version = 11 : i64} {
  func.func @_uptake_kernel(%arg0: memref<1x1xf32, #tpu.memory_space<smem>>, %arg1: memref<128x1xf32, #tpu.memory_space<vmem>>, %arg2: memref<128x1xf32, #tpu.memory_space<vmem>>, %arg3: memref<1x128xf32, #tpu.memory_space<vmem>>, %arg4: memref<128x128xbf16, #tpu.memory_space<vmem>>) attributes {dimension_semantics = [], scalar_prefetch = 0 : i64, scratch_operands = 0 : i64, tpu.core_type = #tpu.core_type<tc>} {
    %c0 = arith.constant 0 : index
    %c0_0 = arith.constant 0 : index
    %0 = memref.load %arg0[%c0, %c0_0] : memref<1x1xf32, #tpu.memory_space<smem>>
    %cst = arith.constant 8.31446266 : f32
    %1 = arith.mulf %cst, %0 : f32
    %cst_1 = arith.constant 1.000000e+00 : f32
    %2 = arith.divf %cst_1, %1 : f32
    %c0_2 = arith.constant 0 : index
    %c0_3 = arith.constant 0 : index
    %3 = vector.load %arg1[%c0_2, %c0_3] : memref<128x1xf32, #tpu.memory_space<vmem>>, vector<128x1xf32>
    %4 = vector.broadcast %2 : f32 to vector<128x1xf32>
    %5 = arith.mulf %3, %4 : vector<128x1xf32>
    %6 = math.exp %5 : vector<128x1xf32>
    %c0_4 = arith.constant 0 : index
    %c0_5 = arith.constant 0 : index
    %7 = vector.load %arg2[%c0_4, %c0_5] : memref<128x1xf32, #tpu.memory_space<vmem>>, vector<128x1xf32>
    %cst_6 = arith.constant 1.000000e+00 : f32
    %8 = vector.broadcast %cst_6 : f32 to vector<128x1xf32>
    %9 = arith.addf %8, %6 : vector<128x1xf32>
    %10 = arith.divf %7, %9 : vector<128x1xf32>
    %c0_7 = arith.constant 0 : index
    %c0_8 = arith.constant 0 : index
    %11 = vector.load %arg3[%c0_7, %c0_8] : memref<1x128xf32, #tpu.memory_space<vmem>>, vector<1x128xf32>
    %12 = vector.broadcast %10 : vector<128x1xf32> to vector<128x128xf32>
    %13 = vector.broadcast %11 : vector<1x128xf32> to vector<128x128xf32>
    %14 = arith.mulf %12, %13 : vector<128x128xf32>
    %cst_9 = arith.constant 0.000000e+00 : f32
    %15 = vector.broadcast %cst_9 : f32 to vector<128x128xf32>
    %16 = arith.subf %15, %14 : vector<128x128xf32>
    %17 = math.exp %16 : vector<128x128xf32>
    %cst_10 = arith.constant 1.000000e+00 : f32
    %18 = vector.broadcast %cst_10 : f32 to vector<128x128xf32>
    %19 = arith.subf %18, %17 : vector<128x128xf32>
    %20 = arith.truncf %19 : vector<128x128xf32> to vector<128x128xbf16>
    %c0_11 = arith.constant 0 : index
    %c0_12 = arith.constant 0 : index
    %21 = vector.load %arg4[%c0_11, %c0_12] : memref<128x128xbf16, #tpu.memory_space<vmem>>, vector<128x128xbf16>
    tpu.vector_store %arg4[%c0_11, %c0_12], %20 {strides = array<i32>} : memref<128x128xbf16, #tpu.memory_space<vmem>>, vector<128x128xbf16>,
    return
  }
}

</mosaic_0001>

<llo_original>
// kernel: tpu_custom_call.1
$region0: #{tpu_custom_call.1}
  #allocation0 [shape = 'u32[]', space=smem, size = 0x4, offset = 0x4, fixed_abs, tag = 'smem constant byte address 0x4 - core index']
  #allocation1 [shape = 'u32[72,128]{1,0:T(1,128)}', space=vmem, size = 0x9000, scoped, tag = 'internal scratch']
  #allocation2 [shape = 'f32[1,1]{1,0:T(1,128)S(6)}', space=smem, size = 0x200, scoped, tag = 'scoped memory for tpu_custom_call.1']
  %s0 = inlined_call_operand.<no memory space> [shape: f32[1,1], index: 0, kind: input, shape index: {}]
  %s1 = inlined_call_operand.vmem [shape: f32[128,1], index: 1, kind: input, shape index: {}]
  %s2 = inlined_call_operand.vmem [shape: f32[128,1], index: 2, kind: input, shape index: {}]
  %s3 = inlined_call_operand.vmem [shape: f32[1,128], index: 3, kind: input, shape index: {}]
  %s4 = inlined_call_operand.hbm [shape: bf16[128,128], index: 4, kind: output, shape index: {}]
  %s5 = sld [smem:[#allocation0]]
  $region26: #{tpu_custom_call.1} parent=0
    _
  %s7 = ssub.s32 1, %s5
  %s8 = scalar_select 0, %s7, %s5
  %9 = sst [smem:[#allocation2]] %s0
  $region1: #{tpu_custom_call.1} parent=0
    #allocation3 [shape = 'u8[32768]{0}', space=vmem, size = 0x8000, scoped, tag = 'output window, operand 0, single buffered']
    #allocation4 [shape = 's32[1]{0}', space=sflag, size = 0x4, scoped, tag = 'scoped memory for tpu_custom_call.1']
    %10 = vsyncpa [#allocation4], 0
    // Predicated region
    $region2: #{tpu_custom_call.1} parent=1 // pred_check
      _
    $region3: #{tpu_custom_call.1} parent=1 // pred_check_branch
      %12 = sbr.rel (0) target = $region5
    $region4: #{tpu_custom_call.1} parent=1 // pred_region
      _
    $region5: #{tpu_custom_call.1} parent=1 // pred_fallthru
      _
    // Predicated region
    $region6: #{tpu_custom_call.1} parent=1 // pred_check
      _
    $region7: #{tpu_custom_call.1} parent=1 // pred_check_branch
      %14 = sbr.rel (0) target = $region9
    $region8: #{tpu_custom_call.1} parent=1 // pred_region
      _
    $region9: #{tpu_custom_call.1} parent=1 // pred_fallthru
      _
    // Predicated region
    $region10: #{tpu_custom_call.1} parent=1 // pred_check
      _
    $region11: #{tpu_custom_call.1} parent=1 // pred_check_branch
      %16 = sbr.rel (0) target = $region13
    $region12: #{tpu_custom_call.1} parent=1 // pred_region
      _
    $region13: #{tpu_custom_call.1} parent=1 // pred_fallthru
      _
    // Predicated region
    $region14: #{tpu_custom_call.1} parent=1 // pred_check
      _
    $region15: #{tpu_custom_call.1} parent=1 // pred_check_branch
      %18 = sbr.rel (0) target = $region17
    $region16: #{tpu_custom_call.1} parent=1 // pred_region
      _
    $region17: #{tpu_custom_call.1} parent=1 // pred_fallthru
      _
    %s19 = sld [smem:[#allocation2]]
    %s20 = smul.f32 %s19, 8.314463
    %v21 = vstv %s20
    %v22 = vrcp.pop %v21
    %v23 = vmul.f32 %v21, %v22
    %v24 = vsub.f32 1.0, %v23
    %v25 = vmul.f32 %v22, %v24
    %v26 = vadd.f32 %v22, %v25
    %vm27 = vweird.f32 %v21
    %vm28 = vweird.f32 %v22
    %vm29 = vmor %vm27, %vm28
    %v30 = vsel %vm29, %v22, %v26
    %v31 = vand.u32 2147483647, %v21
    %vm32 = vcmp.eq.f32.partialorder %v31, 8.507059e+37
    %v33 = vand.u32 %v21, 2147483648
    %v34 = vor.u32 1.1754944e-38, %v33
    %v35 = vsel %vm32, %v34, %v30
    %s36 = vtos %v35
    %v37 = vld [vmem:[%s1] sm:$0xff]
    %v38 = vld [vmem:[%s1 + $0x8] sm:$0xff]
    %v39 = vld [vmem:[%s1 + $0x10] sm:$0xff]
    %v40 = vld [vmem:[%s1 + $0x18] sm:$0xff]
    %v41 = vld [vmem:[%s1 + $0x20] sm:$0xff]
    %v42 = vld [vmem:[%s1 + $0x28] sm:$0xff]
    %v43 = vld [vmem:[%s1 + $0x30] sm:$0xff]
    %v44 = vld [vmem:[%s1 + $0x38] sm:$0xff]
    %v45 = vld [vmem:[%s1 + $0x40] sm:$0xff]
    %v46 = vld [vmem:[%s1 + $0x48] sm:$0xff]
    %v47 = vld [vmem:[%s1 + $0x50] sm:$0xff]
    %v48 = vld [vmem:[%s1 + $0x58] sm:$0xff]
    %v49 = vld [vmem:[%s1 + $0x60] sm:$0xff]
    %v50 = vld [vmem:[%s1 + $0x68] sm:$0xff]
    %v51 = vld [vmem:[%s1 + $0x70] sm:$0xff]
    %v52 = vld [vmem:[%s1 + $0x78] sm:$0xff]
    %v53 = vstv %s36
    %v54 = vmul.f32 %v37, %v53
    %v55 = vmul.f32 %v38, %v53
    %v56 = vmul.f32 %v39, %v53
    %v57 = vmul.f32 %v40, %v53
    %v58 = vmul.f32 %v41, %v53
    %v59 = vmul.f32 %v42, %v53
    %v60 = vmul.f32 %v43, %v53
    %v61 = vmul.f32 %v44, %v53
    %v62 = vmul.f32 %v45, %v53
    %v63 = vmul.f32 %v46, %v53
    %v64 = vmul.f32 %v47, %v53
    %v65 = vmul.f32 %v48, %v53
    %v66 = vmul.f32 %v49, %v53
    %v67 = vmul.f32 %v50, %v53
    %v68 = vmul.f32 %v51, %v53
    %v69 = vmul.f32 %v52, %v53
    %v70 = vmul.f32 %v54, 1.442695
    %v71 = vpow.pop %v70
    %v72 = vmul.f32 %v55, 1.442695
    %v73 = vpow.pop %v72
    %v74 = vmul.f32 %v56, 1.442695
    %v75 = vpow.pop %v74
    %v76 = vmul.f32 %v57, 1.442695
    %v77 = vpow.pop %v76
    %v78 = vmul.f32 %v58, 1.442695
    %v79 = vpow.pop %v78
    %v80 = vmul.f32 %v59, 1.442695
    %v81 = vpow.pop %v80
    %v82 = vmul.f32 %v60, 1.442695
    %v83 = vpow.pop %v82
    %v84 = vmul.f32 %v61, 1.442695
    %v85 = vpow.pop %v84
    %v86 = vmul.f32 %v62, 1.442695
    %v87 = vpow.pop %v86
    %v88 = vmul.f32 %v63, 1.442695
    %v89 = vpow.pop %v88
    %v90 = vmul.f32 %v64, 1.442695
    %v91 = vpow.pop %v90
    %v92 = vmul.f32 %v65, 1.442695
    %v93 = vpow.pop %v92
    %v94 = vmul.f32 %v66, 1.442695
    %v95 = vpow.pop %v94
    %v96 = vmul.f32 %v67, 1.442695
    %v97 = vpow.pop %v96
    %v98 = vmul.f32 %v68, 1.442695
    %v99 = vpow.pop %v98
    %v100 = vmul.f32 %v69, 1.442695
    %v101 = vpow.pop %v100
    %v102 = vld [vmem:[%s2] sm:$0xff]
    %v103 = vld [vmem:[%s2 + $0x8] sm:$0xff]
    %v104 = vld [vmem:[%s2 + $0x10] sm:$0xff]
    %v105 = vld [vmem:[%s2 + $0x18] sm:$0xff]
    %v106 = vld [vmem:[%s2 + $0x20] sm:$0xff]
    %v107 = vld [vmem:[%s2 + $0x28] sm:$0xff]
    %v108 = vld [vmem:[%s2 + $0x30] sm:$0xff]
    %v109 = vld [vmem:[%s2 + $0x38] sm:$0xff]
    %v110 = vld [vmem:[%s2 + $0x40] sm:$0xff]
    %v111 = vld [vmem:[%s2 + $0x48] sm:$0xff]
    %v112 = vld [vmem:[%s2 + $0x50] sm:$0xff]
    %v113 = vld [vmem:[%s2 + $0x58] sm:$0xff]
    %v114 = vld [vmem:[%s2 + $0x60] sm:$0xff]
    %v115 = vld [vmem:[%s2 + $0x68] sm:$0xff]
    %v116 = vld [vmem:[%s2 + $0x70] sm:$0xff]
    %v117 = vld [vmem:[%s2 + $0x78] sm:$0xff]
    %v118 = vadd.f32 %v71, 1.0
    %v119 = vadd.f32 %v73, 1.0
    %v120 = vadd.f32 %v75, 1.0
    %v121 = vadd.f32 %v77, 1.0
    %v122 = vadd.f32 %v79, 1.0
    %v123 = vadd.f32 %v81, 1.0
    %v124 = vadd.f32 %v83, 1.0
    %v125 = vadd.f32 %v85, 1.0
    %v126 = vadd.f32 %v87, 1.0
    %v127 = vadd.f32 %v89, 1.0
    %v128 = vadd.f32 %v91, 1.0
    %v129 = vadd.f32 %v93, 1.0
    %v130 = vadd.f32 %v95, 1.0
    %v131 = vadd.f32 %v97, 1.0
    %v132 = vadd.f32 %v99, 1.0
    %v133 = vadd.f32 %v101, 1.0
    %v134 = vrcp.pop %v118
    %v135 = vmul.f32 %v118, %v134
    %v136 = vsub.f32 1.0, %v135
    %v137 = vmul.f32 %v134, %v136
    %v138 = vadd.f32 %v134, %v137
    %vm139 = vweird.f32 %v118
    %vm140 = vweird.f32 %v134
    %vm141 = vmor %vm139, %vm140
    %v142 = vsel %vm141, %v134, %v138
    %v143 = vand.u32 2147483647, %v118
    %vm144 = vcmp.eq.f32.partialorder %v143, 8.507059e+37
    %v145 = vand.u32 %v118, 2147483648
    %v146 = vor.u32 1.1754944e-38, %v145
    %v147 = vsel %vm144, %v146, %v142
    %v148 = vmul.f32 %v102, %v147
    %v149 = vrcp.pop %v119
    %v150 = vmul.f32 %v119, %v149
    %v151 = vsub.f32 1.0, %v150
    %v152 = vmul.f32 %v149, %v151
    %v153 = vadd.f32 %v149, %v152
    %vm154 = vweird.f32 %v119
    %vm155 = vweird.f32 %v149
    %vm156 = vmor %vm154, %vm155
    %v157 = vsel %vm156, %v149, %v153
    %v158 = vand.u32 2147483647, %v119
    %vm159 = vcmp.eq.f32.partialorder %v158, 8.507059e+37
    %v160 = vand.u32 %v119, 2147483648
    %v161 = vor.u32 1.1754944e-38, %v160
    %v162 = vsel %vm159, %v161, %v157
    %v163 = vmul.f32 %v103, %v162
    %v164 = vrcp.pop %v120
    %v165 = vmul.f32 %v120, %v164
    %v166 = vsub.f32 1.0, %v165
    %v167 = vmul.f32 %v164, %v166
    %v168 = vadd.f32 %v164, %v167
    %vm169 = vweird.f32 %v120
    %vm170 = vweird.f32 %v164
    %vm171 = vmor %vm169, %vm170
    %v172 = vsel %vm171, %v164, %v168
    %v173 = vand.u32 2147483647, %v120
    %vm174 = vcmp.eq.f32.partialorder %v173, 8.507059e+37
    %v175 = vand.u32 %v120, 2147483648
    %v176 = vor.u32 1.1754944e-38, %v175
    %v177 = vsel %vm174, %v176, %v172
    %v178 = vmul.f32 %v104, %v177
    %v179 = vrcp.pop %v121
    %v180 = vmul.f32 %v121, %v179
    %v181 = vsub.f32 1.0, %v180
    %v182 = vmul.f32 %v179, %v181
    %v183 = vadd.f32 %v179, %v182
    %vm184 = vweird.f32 %v121
    %vm185 = vweird.f32 %v179
    %vm186 = vmor %vm184, %vm185
    %v187 = vsel %vm186, %v179, %v183
    %v188 = vand.u32 2147483647, %v121
    %vm189 = vcmp.eq.f32.partialorder %v188, 8.507059e+37
    %v190 = vand.u32 %v121, 2147483648
    %v191 = vor.u32 1.1754944e-38, %v190
    %v192 = vsel %vm189, %v191, %v187
    %v193 = vmul.f32 %v105, %v192
    %v194 = vrcp.pop %v122
    %v195 = vmul.f32 %v122, %v194
    %v196 = vsub.f32 1.0, %v195
    %v197 = vmul.f32 %v194, %v196
    %v198 = vadd.f32 %v194, %v197
    %vm199 = vweird.f32 %v122
    %vm200 = vweird.f32 %v194
    %vm201 = vmor %vm199, %vm200
    %v202 = vsel %vm201, %v194, %v198
    %v203 = vand.u32 2147483647, %v122
    %vm204 = vcmp.eq.f32.partialorder %v203, 8.507059e+37
    %v205 = vand.u32 %v122, 2147483648
    %v206 = vor.u32 1.1754944e-38, %v205
    %v207 = vsel %vm204, %v206, %v202
    %v208 = vmul.f32 %v106, %v207
    %v209 = vrcp.pop %v123
    %v210 = vmul.f32 %v123, %v209
    %v211 = vsub.f32 1.0, %v210
    %v212 = vmul.f32 %v209, %v211
    %v213 = vadd.f32 %v209, %v212
    %vm214 = vweird.f32 %v123
    %vm215 = vweird.f32 %v209
    %vm216 = vmor %vm214, %vm215
    %v217 = vsel %vm216, %v209, %v213
    %v218 = vand.u32 2147483647, %v123
    %vm219 = vcmp.eq.f32.partialorder %v218, 8.507059e+37
    %v220 = vand.u32 %v123, 2147483648
    %v221 = vor.u32 1.1754944e-38, %v220
    %v222 = vsel %vm219, %v221, %v217
    %v223 = vmul.f32 %v107, %v222
    %v224 = vrcp.pop %v124
    %v225 = vmul.f32 %v124, %v224
    %v226 = vsub.f32 1.0, %v225
    %v227 = vmul.f32 %v224, %v226
    %v228 = vadd.f32 %v224, %v227
    %vm229 = vweird.f32 %v124
    %vm230 = vweird.f32 %v224
    %vm231 = vmor %vm229, %vm230
    %v232 = vsel %vm231, %v224, %v228
    %v233 = vand.u32 2147483647, %v124
    %vm234 = vcmp.eq.f32.partialorder %v233, 8.507059e+37
    %v235 = vand.u32 %v124, 2147483648
    %v236 = vor.u32 1.1754944e-38, %v235
    %v237 = vsel %vm234, %v236, %v232
    %v238 = vmul.f32 %v108, %v237
    %v239 = vrcp.pop %v125
    %v240 = vmul.f32 %v125, %v239
    %v241 = vsub.f32 1.0, %v240
    %v242 = vmul.f32 %v239, %v241
    %v243 = vadd.f32 %v239, %v242
    %vm244 = vweird.f32 %v125
    %vm245 = vweird.f32 %v239
    %vm246 = vmor %vm244, %vm245
    %v247 = vsel %vm246, %v239, %v243
    %v248 = vand.u32 2147483647, %v125
    %vm249 = vcmp.eq.f32.partialorder %v248, 8.507059e+37
    %v250 = vand.u32 %v125, 2147483648
    %v251 = vor.u32 1.1754944e-38, %v250
    %v252 = vsel %vm249, %v251, %v247
    %v253 = vmul.f32 %v109, %v252
    %v254 = vrcp.pop %v126
    %v255 = vmul.f32 %v126, %v254
    %v256 = vsub.f32 1.0, %v255
    %v257 = vmul.f32 %v254, %v256
    %v258 = vadd.f32 %v254, %v257
    %vm259 = vweird.f32 %v126
    %vm260 = vweird.f32 %v254
    %vm261 = vmor %vm259, %vm260
    %v262 = vsel %vm261, %v254, %v258
    %v263 = vand.u32 2147483647, %v126
    %vm264 = vcmp.eq.f32.partialorder %v263, 8.507059e+37
    %v265 = vand.u32 %v126, 2147483648
    %v266 = vor.u32 1.1754944e-38, %v265
    %v267 = vsel %vm264, %v266, %v262
    %v268 = vmul.f32 %v110, %v267
    %v269 = vrcp.pop %v127
    %v270 = vmul.f32 %v127, %v269
    %v271 = vsub.f32 1.0, %v270
    %v272 = vmul.f32 %v269, %v271
    %v273 = vadd.f32 %v269, %v272
    %vm274 = vweird.f32 %v127
    %vm275 = vweird.f32 %v269
    %vm276 = vmor %vm274, %vm275
    %v277 = vsel %vm276, %v269, %v273
    %v278 = vand.u32 2147483647, %v127
    %vm279 = vcmp.eq.f32.partialorder %v278, 8.507059e+37
    %v280 = vand.u32 %v127, 2147483648
    %v281 = vor.u32 1.1754944e-38, %v280
    %v282 = vsel %vm279, %v281, %v277
    %v283 = vmul.f32 %v111, %v282
    %v284 = vrcp.pop %v128
    %v285 = vmul.f32 %v128, %v284
    %v286 = vsub.f32 1.0, %v285
    %v287 = vmul.f32 %v284, %v286
    %v288 = vadd.f32 %v284, %v287
    %vm289 = vweird.f32 %v128
    %vm290 = vweird.f32 %v284
    %vm291 = vmor %vm289, %vm290
    %v292 = vsel %vm291, %v284, %v288
    %v293 = vand.u32 2147483647, %v128
    %vm294 = vcmp.eq.f32.partialorder %v293, 8.507059e+37
    %v295 = vand.u32 %v128, 2147483648
    %v296 = vor.u32 1.1754944e-38, %v295
    %v297 = vsel %vm294, %v296, %v292
    %v298 = vmul.f32 %v112, %v297
    %v299 = vrcp.pop %v129
    %v300 = vmul.f32 %v129, %v299
    %v301 = vsub.f32 1.0, %v300
    %v302 = vmul.f32 %v299, %v301
    %v303 = vadd.f32 %v299, %v302
    %vm304 = vweird.f32 %v129
    %vm305 = vweird.f32 %v299
    %vm306 = vmor %vm304, %vm305
    %v307 = vsel %vm306, %v299, %v303
    %v308 = vand.u32 2147483647, %v129
    %vm309 = vcmp.eq.f32.partialorder %v308, 8.507059e+37
    %v310 = vand.u32 %v129, 2147483648
    %v311 = vor.u32 1.1754944e-38, %v310
    %v312 = vsel %vm309, %v311, %v307
    %v313 = vmul.f32 %v113, %v312
    %v314 = vrcp.pop %v130
    %v315 = vmul.f32 %v130, %v314
    %v316 = vsub.f32 1.0, %v315
    %v317 = vmul.f32 %v314, %v316
    %v318 = vadd.f32 %v314, %v317
    %vm319 = vweird.f32 %v130
    %vm320 = vweird.f32 %v314
    %vm321 = vmor %vm319, %vm320
    %v322 = vsel %vm321, %v314, %v318
    %v323 = vand.u32 2147483647, %v130
    %vm324 = vcmp.eq.f32.partialorder %v323, 8.507059e+37
    %v325 = vand.u32 %v130, 2147483648
    %v326 = vor.u32 1.1754944e-38, %v325
    %v327 = vsel %vm324, %v326, %v322
    %v328 = vmul.f32 %v114, %v327
    %v329 = vrcp.pop %v131
    %v330 = vmul.f32 %v131, %v329
    %v331 = vsub.f32 1.0, %v330
    %v332 = vmul.f32 %v329, %v331
    %v333 = vadd.f32 %v329, %v332
    %vm334 = vweird.f32 %v131
    %vm335 = vweird.f32 %v329
    %vm336 = vmor %vm334, %vm335
    %v337 = vsel %vm336, %v329, %v333
    %v338 = vand.u32 2147483647, %v131
    %vm339 = vcmp.eq.f32.partialorder %v338, 8.507059e+37
    %v340 = vand.u32 %v131, 2147483648
    %v341 = vor.u32 1.1754944e-38, %v340
    %v342 = vsel %vm339, %v341, %v337
    %v343 = vmul.f32 %v115, %v342
    %v344 = vrcp.pop %v132
    %v345 = vmul.f32 %v132, %v344
    %v346 = vsub.f32 1.0, %v345
    %v347 = vmul.f32 %v344, %v346
    %v348 = vadd.f32 %v344, %v347
    %vm349 = vweird.f32 %v132
    %vm350 = vweird.f32 %v344
    %vm351 = vmor %vm349, %vm350
    %v352 = vsel %vm351, %v344, %v348
    %v353 = vand.u32 2147483647, %v132
    %vm354 = vcmp.eq.f32.partialorder %v353, 8.507059e+37
    %v355 = vand.u32 %v132, 2147483648
    %v356 = vor.u32 1.1754944e-38, %v355
    %v357 = vsel %vm354, %v356, %v352
    %v358 = vmul.f32 %v116, %v357
    %v359 = vrcp.pop %v133
    %v360 = vmul.f32 %v133, %v359
    %v361 = vsub.f32 1.0, %v360
    %v362 = vmul.f32 %v359, %v361
    %v363 = vadd.f32 %v359, %v362
    %vm364 = vweird.f32 %v133
    %vm365 = vweird.f32 %v359
    %vm366 = vmor %vm364, %vm365
    %v367 = vsel %vm366, %v359, %v363
    %v368 = vand.u32 2147483647, %v133
    %vm369 = vcmp.eq.f32.partialorder %v368, 8.507059e+37
    %v370 = vand.u32 %v133, 2147483648
    %v371 = vor.u32 1.1754944e-38, %v370
    %v372 = vsel %vm369, %v371, %v367
    %v373 = vmul.f32 %v117, %v372
    %v374 = vld [vmem:[%s3] sm:$0x1]
    %376 = vset.pattern.permute.xlu0 0
    %377 = vperm.xlu0 %376, %v148
    %v378 = vpop.permute.xlu0 %377
    %381 = vset.pattern.permute.xlu0 0
    %382 = vperm.xlu0 %381, %v163
    %v383 = vpop.permute.xlu0 %382
    %386 = vset.pattern.permute.xlu0 0
    %387 = vperm.xlu0 %386, %v178
    %v388 = vpop.permute.xlu0 %387
    %391 = vset.pattern.permute.xlu0 0
    %392 = vperm.xlu0 %391, %v193
    %v393 = vpop.permute.xlu0 %392
    %396 = vset.pattern.permute.xlu0 0
    %397 = vperm.xlu0 %396, %v208
    %v398 = vpop.permute.xlu0 %397
    %401 = vset.pattern.permute.xlu0 0
    %402 = vperm.xlu0 %401, %v223
    %v403 = vpop.permute.xlu0 %402
    %406 = vset.pattern.permute.xlu0 0
    %407 = vperm.xlu0 %406, %v238
    %v408 = vpop.permute.xlu0 %407
    %411 = vset.pattern.permute.xlu0 0
    %412 = vperm.xlu0 %411, %v253
    %v413 = vpop.permute.xlu0 %412
    %416 = vset.pattern.permute.xlu0 0
    %417 = vperm.xlu0 %416, %v268
    %v418 = vpop.permute.xlu0 %417
    %421 = vset.pattern.permute.xlu0 0
    %422 = vperm.xlu0 %421, %v283
    %v423 = vpop.permute.xlu0 %422
    %426 = vset.pattern.permute.xlu0 0
    %427 = vperm.xlu0 %426, %v298
    %v428 = vpop.permute.xlu0 %427
    %431 = vset.pattern.permute.xlu0 0
    %432 = vperm.xlu0 %431, %v313
    %v433 = vpop.permute.xlu0 %432
    %436 = vset.pattern.permute.xlu0 0
    %437 = vperm.xlu0 %436, %v328
    %v438 = vpop.permute.xlu0 %437
    %441 = vset.pattern.permute.xlu0 0
    %442 = vperm.xlu0 %441, %v343
    %v443 = vpop.permute.xlu0 %442
    %446 = vset.pattern.permute.xlu0 0
    %447 = vperm.xlu0 %446, %v358
    %v448 = vpop.permute.xlu0 %447
    %451 = vset.pattern.permute.xlu0 0
    %452 = vperm.xlu0 %451, %v373
    %v453 = vpop.permute.xlu0 %452
    %v456 = vperm.slane %v374, 0
    %v458 = vmul.f32 %v378, %v456
    %v459 = vmul.f32 %v383, %v456
    %v460 = vmul.f32 %v388, %v456
    %v461 = vmul.f32 %v393, %v456
    %v462 = vmul.f32 %v398, %v456
    %v463 = vmul.f32 %v403, %v456
    %v464 = vmul.f32 %v408, %v456
    %v465 = vmul.f32 %v413, %v456
    %v466 = vmul.f32 %v418, %v456
    %v467 = vmul.f32 %v423, %v456
    %v468 = vmul.f32 %v428, %v456
    %v469 = vmul.f32 %v433, %v456
    %v470 = vmul.f32 %v438, %v456
    %v471 = vmul.f32 %v443, %v456
    %v472 = vmul.f32 %v448, %v456
    %v473 = vmul.f32 %v453, %v456
    %v474 = vsub.f32 0.0, %v458
    %v475 = vsub.f32 0.0, %v459
    %v476 = vsub.f32 0.0, %v460
    %v477 = vsub.f32 0.0, %v461
    %v478 = vsub.f32 0.0, %v462
    %v479 = vsub.f32 0.0, %v463
    %v480 = vsub.f32 0.0, %v464
    %v481 = vsub.f32 0.0, %v465
    %v482 = vsub.f32 0.0, %v466
    %v483 = vsub.f32 0.0, %v467
    %v484 = vsub.f32 0.0, %v468
    %v485 = vsub.f32 0.0, %v469
    %v486 = vsub.f32 0.0, %v470
    %v487 = vsub.f32 0.0, %v471
    %v488 = vsub.f32 0.0, %v472
    %v489 = vsub.f32 0.0, %v473
    %v490 = vmul.f32 %v474, 1.442695
    %v491 = vpow.pop %v490
    %v492 = vmul.f32 %v475, 1.442695
    %v493 = vpow.pop %v492
    %v494 = vmul.f32 %v476, 1.442695
    %v495 = vpow.pop %v494
    %v496 = vmul.f32 %v477, 1.442695
    %v497 = vpow.pop %v496
    %v498 = vmul.f32 %v478, 1.442695
    %v499 = vpow.pop %v498
    %v500 = vmul.f32 %v479, 1.442695
    %v501 = vpow.pop %v500
    %v502 = vmul.f32 %v480, 1.442695
    %v503 = vpow.pop %v502
    %v504 = vmul.f32 %v481, 1.442695
    %v505 = vpow.pop %v504
    %v506 = vmul.f32 %v482, 1.442695
    %v507 = vpow.pop %v506
    %v508 = vmul.f32 %v483, 1.442695
    %v509 = vpow.pop %v508
    %v510 = vmul.f32 %v484, 1.442695
    %v511 = vpow.pop %v510
    %v512 = vmul.f32 %v485, 1.442695
    %v513 = vpow.pop %v512
    %v514 = vmul.f32 %v486, 1.442695
    %v515 = vpow.pop %v514
    %v516 = vmul.f32 %v487, 1.442695
    %v517 = vpow.pop %v516
    %v518 = vmul.f32 %v488, 1.442695
    %v519 = vpow.pop %v518
    %v520 = vmul.f32 %v489, 1.442695
    %v521 = vpow.pop %v520
    %v522 = vsub.f32 1.0, %v491
    %v523 = vsub.f32 1.0, %v493
    %v524 = vsub.f32 1.0, %v495
    %v525 = vsub.f32 1.0, %v497
    %v526 = vsub.f32 1.0, %v499
    %v527 = vsub.f32 1.0, %v501
    %v528 = vsub.f32 1.0, %v503
    %v529 = vsub.f32 1.0, %v505
    %v530 = vsub.f32 1.0, %v507
    %v531 = vsub.f32 1.0, %v509
    %v532 = vsub.f32 1.0, %v511
    %v533 = vsub.f32 1.0, %v513
    %v534 = vsub.f32 1.0, %v515
    %v535 = vsub.f32 1.0, %v517
    %v536 = vsub.f32 1.0, %v519
    %v537 = vsub.f32 1.0, %v521
    %v538 = vpack.c.bf16 %v522, %v522
    %v539 = vpack.c.bf16 %v523, %v523
    %v540 = vpack.c.bf16 %v524, %v524
    %v541 = vpack.c.bf16 %v525, %v525
    %v542 = vpack.c.bf16 %v526, %v526
    %v543 = vpack.c.bf16 %v527, %v527
    %v544 = vpack.c.bf16 %v528, %v528
    %v545 = vpack.c.bf16 %v529, %v529
    %v546 = vpack.c.bf16 %v530, %v530
    %v547 = vpack.c.bf16 %v531, %v531
    %v548 = vpack.c.bf16 %v532, %v532
    %v549 = vpack.c.bf16 %v533, %v533
    %v550 = vpack.c.bf16 %v534, %v534
    %v551 = vpack.c.bf16 %v535, %v535
    %v552 = vpack.c.bf16 %v536, %v536
    %v553 = vpack.c.bf16 %v537, %v537
    %554 = vst [vmem:[#allocation3] sm:$0xf] %v538
    %555 = vst [vmem:[#allocation3 + $0x4] sm:$0xf] %v539
    %556 = vst [vmem:[#allocation3 + $0x8] sm:$0xf] %v540
    %557 = vst [vmem:[#allocation3 + $0xc] sm:$0xf] %v541
    %558 = vst [vmem:[#allocation3 + $0x10] sm:$0xf] %v542
    %559 = vst [vmem:[#allocation3 + $0x14] sm:$0xf] %v543
    %560 = vst [vmem:[#allocation3 + $0x18] sm:$0xf] %v544
    %561 = vst [vmem:[#allocation3 + $0x1c] sm:$0xf] %v545
    %562 = vst [vmem:[#allocation3 + $0x20] sm:$0xf] %v546
    %563 = vst [vmem:[#allocation3 + $0x24] sm:$0xf] %v547
    %564 = vst [vmem:[#allocation3 + $0x28] sm:$0xf] %v548
    %565 = vst [vmem:[#allocation3 + $0x2c] sm:$0xf] %v549
    %566 = vst [vmem:[#allocation3 + $0x30] sm:$0xf] %v550
    %567 = vst [vmem:[#allocation3 + $0x34] sm:$0xf] %v551
    %568 = vst [vmem:[#allocation3 + $0x38] sm:$0xf] %v552
    %569 = vst [vmem:[#allocation3 + $0x3c] sm:$0xf] %v553
    // Predicated region
    $region18: #{tpu_custom_call.1} parent=1 // pred_check
      _
    $region19: #{tpu_custom_call.1} parent=1 // pred_check_branch
      %571 = sbr.rel (0) target = $region21
    $region20: #{tpu_custom_call.1} parent=1 // pred_region
      %573 = vsyncadd [#allocation4], 0
      %s574 = sshll.u32 [#allocation3], 4
      %s575 = int_to_ptr.vmem [resolvable:$true] %s574
      %s576 = sshll.u32 %s4, 4
      %s577 = int_to_ptr.hbm [resolvable:$true] %s576
      %582 = dma.vmem_to_hbm [thread:$0]  %s575, 1024, %s577, [#allocation4], 64, 64, 4
    $region21: #{tpu_custom_call.1} parent=1 // pred_fallthru
      _
    // Predicated region
    $region22: #{tpu_custom_call.1} parent=1 // pred_check
      _
    $region23: #{tpu_custom_call.1} parent=1 // pred_check_branch
      %584 = sbr.rel (0) target = $region25
    $region24: #{tpu_custom_call.1} parent=1 // pred_region
      %586 = dma.done [#allocation4], 1024
    $region25: #{tpu_custom_call.1} parent=1 // pred_fallthru
      _
    %587 = vsyncpa [#allocation4], 1

</llo_original>
